<compile_context>
chip_gen: v5e
topology: v5e:2x2
jax: 0.10.0
libtpu: 0.0.40
codegen_flags: <defaults>
</compile_context>

<pallas_src>
import math

import jax
import jax.numpy as jnp
from jax.experimental import pallas as pl
from jax.experimental.pallas import tpu as pltpu

_LANE = 128


def _round_up(x, m):
    return ((x + m - 1) // m) * m


def _gabor_kernel(neg_b2_ref, omega_ref, n_ref, n2_ref, out_ref):
    # neg_b2_ref, omega_ref : (1, L)  lane-dense per-row constants
    # n_ref, n2_ref         : (T, 1)  flipped tap values (resident constants)
    # out_ref               : (T, L)
    neg_b2 = neg_b2_ref[...]
    omega = omega_ref[...]
    n = n_ref[...]
    n2 = n2_ref[...]
    # y[t, r] = exp(-b[r]^2 * n[t]^2) * cos(omega_c[r] * n[t])
    y = jnp.exp(n2 * neg_b2) * jnp.cos(n * omega)
    out_ref[...] = y.astype(out_ref.dtype)


def gabor_variable_response(fc, q, *, filt_dim, fs):
    """fc, q: (B, N_filt) float32. Returns y: (B, N_filt, filt_dim - 1) float32."""
    B, F = fc.shape
    T = int(filt_dim) - 1
    rows = B * F
    fs = float(fs)

    fc32 = fc.reshape(rows).astype(jnp.float32)
    q32 = q.reshape(rows).astype(jnp.float32)

    # Fold BW/alpha/b/Omega_c into two per-row constants at trace time
    # (tiny (rows,) arrays, computed once by XLA outside the kernel).
    b = fc32 * (0.5 * math.sqrt(2.0 * math.pi) / fs) / q32
    neg_b2 = -(b * b)
    omega_c = (2.0 * math.pi / fs) * fc32

    # Tiling: B*F -> lanes (lane-dense output), T -> sublanes (full extent).
    rows_128 = _round_up(rows, _LANE)
    target_block_bytes = 2 * 1024 * 1024          # ~2 MiB per output block
    lane_tile = (target_block_bytes // (4 * max(T, 1))) // _LANE * _LANE
    lane_tile = max(_LANE, min(lane_tile, rows_128))
    # Give both v7x TensorCores work when the problem is big enough.
    if rows_128 // lane_tile < 2 and lane_tile >= 2 * _LANE:
        lane_tile //= 2
    rows_padded = _round_up(rows, lane_tile)
    grid = (rows_padded // lane_tile,)

    pad = rows_padded - rows
    neg_b2_p = jnp.pad(neg_b2, (0, pad)).reshape(1, rows_padded)
    omega_p = jnp.pad(omega_c, (0, pad)).reshape(1, rows_padded)

    # Flip folded in: output tap index t corresponds to nT value (T - t),
    # since nT = [1, ..., T] and y = flip(y_right, axis=-1).
    n_flip = (jnp.float32(T) - jnp.arange(T, dtype=jnp.float32)).reshape(T, 1)
    n2_flip = n_flip * n_flip

    out_flat = pl.pallas_call(
        _gabor_kernel,
        out_shape=jax.ShapeDtypeStruct((T, rows_padded), jnp.float32),
        grid_spec=pltpu.PrefetchScalarGridSpec(
            num_scalar_prefetch=0,
            grid=grid,
            in_specs=[
                pl.BlockSpec((1, lane_tile), lambda i: (0, i)),
                pl.BlockSpec((1, lane_tile), lambda i: (0, i)),
                pl.BlockSpec((T, 1), lambda i: (0, 0)),
                pl.BlockSpec((T, 1), lambda i: (0, 0)),
            ],
            out_specs=pl.BlockSpec((T, lane_tile), lambda i: (0, i)),
        ),
        compiler_params=pltpu.CompilerParams(
            dimension_semantics=("parallel",)),
    )(neg_b2_p, omega_p, n_flip, n2_flip)

    y = out_flat[:, :rows]                        # (T, rows): drop lane padding
    return jnp.transpose(y).reshape(B, F, T)      # layout plumbing back to (B,F,T)


def gabor_reference(fc, q, *, filt_dim, fs):
    """Pure-JAX reference mirroring the PyTorch forward (float32)."""
    T = int(filt_dim) - 1
    nT = jnp.arange(1, T + 1, dtype=jnp.float32)          # linspace(1, N-1, N-1)
    bw = fc / q
    alpha = bw / 2.0 * jnp.sqrt(2.0 * jnp.pi)
    b = alpha / fs
    omega_c = 2.0 * jnp.pi * fc / fs
    n = jnp.broadcast_to(nT, fc.shape + (T,))
    y_right = jnp.exp(-(b[..., None] ** 2) * n ** 2) * jnp.cos(omega_c[..., None] * n)
    return jnp.flip(y_right, axis=-1)


if __name__ == "__main__":
    # Small, deterministic setup consistent with the module.
    Batch_Size = 2
    N_filt = 4
    Filt_dim = 17          # -> T = 16 taps
    fs = 16000.0

    key = jax.random.PRNGKey(0)
    k_fc, k_q = jax.random.split(key)

    # Deterministic center frequencies in [30, fs/2 - 100], per batch/filter.
    base = jnp.linspace(30.0, fs / 2.0 - 100.0, N_filt, dtype=jnp.float32)
    fc = jnp.broadcast_to(base, (Batch_Size, N_filt)) \
         + 10.0 * jax.random.uniform(k_fc, (Batch_Size, N_filt), dtype=jnp.float32)
    # QTemp: quality factors in [2, 10].
    q = 2.0 + 8.0 * jax.random.uniform(k_q, (Batch_Size, N_filt), dtype=jnp.float32)

    y = gabor_variable_response(fc, q, filt_dim=Filt_dim, fs=fs)
    y = jax.block_until_ready(y)

    y_ref = gabor_reference(fc, q, filt_dim=Filt_dim, fs=fs)
    assert y.shape == (Batch_Size, N_filt, Filt_dim - 1)
    assert jnp.allclose(y, y_ref, atol=1e-5, rtol=1e-5)

    print("KERNEL_OK")
</pallas_src>

<mosaic_0001>
module attributes {stable_mosaic.version = 11 : i64} {
  func.func @_gabor_kernel(%arg0: i32, %arg1: memref<1x128xf32, #tpu.memory_space<vmem>>, %arg2: memref<1x128xf32, #tpu.memory_space<vmem>>, %arg3: memref<16x1xf32, #tpu.memory_space<vmem>>, %arg4: memref<16x1xf32, #tpu.memory_space<vmem>>, %arg5: memref<16x128xf32, #tpu.memory_space<vmem>>) attributes {dimension_semantics = [#tpu.dimension_semantics<parallel>], iteration_bounds = array<i64: 1>, scalar_prefetch = 0 : i64, scratch_operands = 0 : i64, tpu.core_type = #tpu.core_type<tc>, window_params = [{transform_indices = @transform_0, window_bounds = array<i64: 1, 128>}, {transform_indices = @transform_1, window_bounds = array<i64: 1, 128>}, {pipeline_mode = #tpu.pipeline_mode<synchronous>, transform_indices = @transform_2, window_bounds = array<i64: 16, 1>}, {pipeline_mode = #tpu.pipeline_mode<synchronous>, transform_indices = @transform_3, window_bounds = array<i64: 16, 1>}, {transform_indices = @transform_4, window_bounds = array<i64: 16, 128>}]} {
    %c0 = arith.constant 0 : index
    %c0_0 = arith.constant 0 : index
    %0 = vector.load %arg1[%c0, %c0_0] : memref<1x128xf32, #tpu.memory_space<vmem>>, vector<1x128xf32>
    %c0_1 = arith.constant 0 : index
    %c0_2 = arith.constant 0 : index
    %1 = vector.load %arg2[%c0_1, %c0_2] : memref<1x128xf32, #tpu.memory_space<vmem>>, vector<1x128xf32>
    %c0_3 = arith.constant 0 : index
    %c0_4 = arith.constant 0 : index
    %2 = vector.load %arg3[%c0_3, %c0_4] : memref<16x1xf32, #tpu.memory_space<vmem>>, vector<16x1xf32>
    %c0_5 = arith.constant 0 : index
    %c0_6 = arith.constant 0 : index
    %3 = vector.load %arg4[%c0_5, %c0_6] : memref<16x1xf32, #tpu.memory_space<vmem>>, vector<16x1xf32>
    %4 = vector.broadcast %3 : vector<16x1xf32> to vector<16x128xf32>
    %5 = vector.broadcast %0 : vector<1x128xf32> to vector<16x128xf32>
    %6 = arith.mulf %4, %5 : vector<16x128xf32>
    %7 = math.exp %6 : vector<16x128xf32>
    %8 = vector.broadcast %2 : vector<16x1xf32> to vector<16x128xf32>
    %9 = vector.broadcast %1 : vector<1x128xf32> to vector<16x128xf32>
    %10 = arith.mulf %8, %9 : vector<16x128xf32>
    %11 = math.cos %10 : vector<16x128xf32>
    %12 = arith.mulf %7, %11 : vector<16x128xf32>
    %c0_7 = arith.constant 0 : index
    %c0_8 = arith.constant 0 : index
    %13 = vector.load %arg5[%c0_7, %c0_8] : memref<16x128xf32, #tpu.memory_space<vmem>>, vector<16x128xf32>
    tpu.vector_store %arg5[%c0_7, %c0_8], %12 {strides = array<i32>} : memref<16x128xf32, #tpu.memory_space<vmem>>, vector<16x128xf32>,
    return
  }
  func.func @transform_0(%arg0: i32) -> (i32, i32) {
    %c0_i32 = arith.constant 0 : i32
    %c0_i32_0 = arith.constant 0 : i32
    return %c0_i32, %arg0 : i32, i32
  }
  func.func @transform_1(%arg0: i32) -> (i32, i32) {
    %c0_i32 = arith.constant 0 : i32
    %c0_i32_0 = arith.constant 0 : i32
    return %c0_i32, %arg0 : i32, i32
  }
  func.func @transform_2(%arg0: i32) -> (i32, i32) {
    %c0_i32 = arith.constant 0 : i32
    %c0_i32_0 = arith.constant 0 : i32
    %c0_i32_1 = arith.constant 0 : i32
    return %c0_i32, %c0_i32_0 : i32, i32
  }
  func.func @transform_3(%arg0: i32) -> (i32, i32) {
    %c0_i32 = arith.constant 0 : i32
    %c0_i32_0 = arith.constant 0 : i32
    %c0_i32_1 = arith.constant 0 : i32
    return %c0_i32, %c0_i32_0 : i32, i32
  }
  func.func @transform_4(%arg0: i32) -> (i32, i32) {
    %c0_i32 = arith.constant 0 : i32
    %c0_i32_0 = arith.constant 0 : i32
    return %c0_i32, %arg0 : i32, i32
  }
}

</mosaic_0001>

<llo_original>
// kernel: tpu_custom_call.1
$region0: #{tpu_custom_call.1}
  #allocation0 [shape = 'u32[]', space=smem, size = 0x4, offset = 0x4, fixed_abs, tag = 'smem constant byte address 0x4 - core index']
  #allocation1 [shape = 'u32[72,128]{1,0:T(1,128)}', space=vmem, size = 0x9000, scoped, tag = 'internal scratch']
  %s0 = inlined_call_operand.vmem [shape: f32[1,128], index: 0, kind: input, shape index: {}]
  %s1 = inlined_call_operand.vmem [shape: f32[1,128], index: 1, kind: input, shape index: {}]
  %s2 = inlined_call_operand.vmem [shape: f32[16,1], index: 2, kind: input, shape index: {}]
  %s3 = inlined_call_operand.vmem [shape: f32[16,1], index: 3, kind: input, shape index: {}]
  %s4 = inlined_call_operand.hbm [shape: f32[16,128], index: 4, kind: output, shape index: {}]
  %s5 = sld [smem:[#allocation0]]
  $region26: #{tpu_custom_call.1} parent=0
    _
  %s7 = ssub.s32 1, %s5
  %s8 = scalar_select 0, %s7, %s5
  $region1: #{tpu_custom_call.1} parent=0
    #allocation2 [shape = 'u8[8192]{0}', space=vmem, size = 0x2000, scoped, tag = 'output window, operand 0, single buffered']
    #allocation3 [shape = 's32[1]{0}', space=sflag, size = 0x4, scoped, tag = 'scoped memory for tpu_custom_call.1']
    %9 = vsyncpa [#allocation3], 0
    // Predicated region
    $region2: #{tpu_custom_call.1} parent=1 // pred_check
      _
    $region3: #{tpu_custom_call.1} parent=1 // pred_check_branch
      %11 = sbr.rel (0) target = $region5
    $region4: #{tpu_custom_call.1} parent=1 // pred_region
      _
    $region5: #{tpu_custom_call.1} parent=1 // pred_fallthru
      _
    // Predicated region
    $region6: #{tpu_custom_call.1} parent=1 // pred_check
      _
    $region7: #{tpu_custom_call.1} parent=1 // pred_check_branch
      %13 = sbr.rel (0) target = $region9
    $region8: #{tpu_custom_call.1} parent=1 // pred_region
      _
    $region9: #{tpu_custom_call.1} parent=1 // pred_fallthru
      _
    // Predicated region
    $region10: #{tpu_custom_call.1} parent=1 // pred_check
      _
    $region11: #{tpu_custom_call.1} parent=1 // pred_check_branch
      %15 = sbr.rel (0) target = $region13
    $region12: #{tpu_custom_call.1} parent=1 // pred_region
      _
    $region13: #{tpu_custom_call.1} parent=1 // pred_fallthru
      _
    // Predicated region
    $region14: #{tpu_custom_call.1} parent=1 // pred_check
      _
    $region15: #{tpu_custom_call.1} parent=1 // pred_check_branch
      %17 = sbr.rel (0) target = $region17
    $region16: #{tpu_custom_call.1} parent=1 // pred_region
      _
    $region17: #{tpu_custom_call.1} parent=1 // pred_fallthru
      _
    %v18 = vld [vmem:[%s0] sm:$0x1]
    %v19 = vld [vmem:[%s1] sm:$0x1]
    %v20 = vld [vmem:[%s2] sm:$0xff]
    %v21 = vld [vmem:[%s2 + $0x8] sm:$0xff]
    %v22 = vld [vmem:[%s3] sm:$0xff]
    %v23 = vld [vmem:[%s3 + $0x8] sm:$0xff]
    %25 = vset.pattern.permute.xlu0 0
    %26 = vperm.xlu0 %25, %v22
    %v27 = vpop.permute.xlu0 %26
    %30 = vset.pattern.permute.xlu0 0
    %31 = vperm.xlu0 %30, %v23
    %v32 = vpop.permute.xlu0 %31
    %v35 = vperm.slane %v18, 0
    %v37 = vmul.f32 %v27, %v35
    %v38 = vmul.f32 %v32, %v35
    %v39 = vmul.f32 %v37, 1.442695
    %v40 = vpow.pop %v39
    %v41 = vmul.f32 %v38, 1.442695
    %v42 = vpow.pop %v41
    %44 = vset.pattern.permute.xlu0 0
    %45 = vperm.xlu0 %44, %v20
    %v46 = vpop.permute.xlu0 %45
    %49 = vset.pattern.permute.xlu0 0
    %50 = vperm.xlu0 %49, %v21
    %v51 = vpop.permute.xlu0 %50
    %v54 = vperm.slane %v19, 0
    %v56 = vmul.f32 %v46, %v54
    %v57 = vmul.f32 %v51, %v54
    %v58 = vand.u32 2147483647, %v56
    %vm59 = vcmp.le.f32.partialorder %v58, 0.7853982
    %vm60 = vcmp.lt.s32.totalorder %v56, 0
    %v61 = vand.u32 %v56, 2139095040
    %v62 = vshrl.u32 %v61, 23
    %v63 = vsub.s32 %v62, 127
    %v64 = vand.u32 2147483647, %v56
    %v65 = vand.u32 %v64, 8388607
    %v66 = vor.u32 %v65, 8388608
    %v67 = vsub.s32 0, %v66
    %v68 = vadd.s32 %v63, 1
    %vm69 = vcmp.gt.s32.totalorder %v68, 0
    %v70 = vsel %vm69, %v68, 0
    %v71 = vshrl.u32 %v70, 5
    %v72 = vand.u32 %v70, 31
    %v73 = vsub.s32 32, %v72
    %v74 = vshrl.u32 683565275, %v73
    %v75 = vshll.u32 683565275, %v72
    %v76 = vshrl.u32 2475754826, %v73
    %v77 = vor.u32 %v75, %v76
    %v78 = vshll.u32 2475754826, %v72
    %v79 = vshrl.u32 2131351028, %v73
    %v80 = vor.u32 %v78, %v79
    %v81 = vshll.u32 2131351028, %v72
    %v82 = vshrl.u32 2102212464, %v73
    %v83 = vor.u32 %v81, %v82
    %v84 = vshll.u32 2102212464, %v72
    %v85 = vshrl.u32 920167782, %v73
    %v86 = vor.u32 %v84, %v85
    %v87 = vshll.u32 920167782, %v72
    %v88 = vshrl.u32 1326507024, %v73
    %v89 = vor.u32 %v87, %v88
    %vm90 = vcmp.lt.s32.totalorder %v71, 1
    %vm91 = vcmp.lt.s32.totalorder %v71, 2
    %vm92 = vcmp.lt.s32.totalorder %v71, 3
    %vm93 = vcmp.lt.s32.totalorder %v71, 4
    %v94 = vsel %vm90, %v74, %v77
    %v95 = vsel %vm93, %v83, 2102212464
    %v96 = vsel %vm92, %v80, %v95
    %v97 = vsel %vm91, %v94, %v96
    %v98 = vsel %vm90, %v77, %v80
    %v99 = vsel %vm93, %v86, 920167782
    %v100 = vsel %vm92, %v83, %v99
    %v101 = vsel %vm91, %v98, %v100
    %v102 = vsel %vm90, %v80, %v83
    %v103 = vsel %vm93, %v89, 1326507024
    %v104 = vsel %vm92, %v86, %v103
    %v105 = vsel %vm91, %v102, %v104
    %v106 = vshll.u32 %v66, 8
    %v107 = vand.u32 %v106, 65535
    %v108 = vshrl.u32 %v106, 16
    %v109 = vand.u32 %v105, 65535
    %v110 = vshrl.u32 %v105, 16
    %v111 = vmul.u32 %v107, %v109
    %v112 = vmul.u32 %v107, %v110
    %v113 = vmul.u32 %v108, %v109
    %v114 = vmul.u32 %v108, %v110
    %v115 = vshll.u32 %v112, 16
    %v116 = vshrl.u32 %v112, 16
    %v117 = vshll.u32 %v113, 16
    %v118 = vshrl.u32 %v113, 16
    %vm119 = vc.u32 %v111, %v115
    %v120 = vsel %vm119, 1, 0
    %v121 = vadd.s32 %v111, %v115
    %v122 = vadd.s32 %v114, %v120
    %vm123 = vc.u32 %v121, %v117
    %v124 = vsel %vm123, 1, 0
    %v125 = vadd.s32 %v121, %v117
    %v126 = vadd.s32 %v122, %v124
    %v127 = vadd.s32 %v126, %v116
    %v128 = vadd.s32 %v127, %v118
    %v129 = vand.u32 %v106, 65535
    %v130 = vshrl.u32 %v106, 16
    %v131 = vand.u32 %v101, 65535
    %v132 = vshrl.u32 %v101, 16
    %v133 = vmul.u32 %v129, %v131
    %v134 = vmul.u32 %v129, %v132
    %v135 = vmul.u32 %v130, %v131
    %v136 = vmul.u32 %v130, %v132
    %v137 = vshll.u32 %v134, 16
    %v138 = vshrl.u32 %v134, 16
    %v139 = vshll.u32 %v135, 16
    %v140 = vshrl.u32 %v135, 16
    %vm141 = vc.u32 %v133, %v137
    %v142 = vsel %vm141, 1, 0
    %v143 = vadd.s32 %v133, %v137
    %v144 = vadd.s32 %v136, %v142
    %vm145 = vc.u32 %v143, %v139
    %v146 = vsel %vm145, 1, 0
    %v147 = vadd.s32 %v143, %v139
    %v148 = vadd.s32 %v144, %v146
    %v149 = vadd.s32 %v148, %v138
    %v150 = vadd.s32 %v149, %v140
    %v151 = vmul.u32 %v106, %v97
    %v152 = vadd.s32 %v128, %v147
    %vm153 = vc.u32 %v128, %v147
    %v154 = vadd.s32 %v150, 1
    %v155 = vsel %vm153, %v154, %v150
    %v156 = vadd.s32 %v151, %v155
    %v157 = vadd.s32 %v156, 536870912
    %v158 = vshrl.u32 %v157, 30
    %v159 = vshll.u32 %v158, 30
    %v160 = vsub.s32 %v156, %v159
    %vm161 = vcmp.lt.s32.totalorder %v160, 0
    %v162 = vsub.s32 0, %v160
    %v163 = vsel %vm161, %v162, %v160
    %v164 = vclz %v163
    %v165 = vsub.s32 %v164, 2
    %vm166 = vcmp.gt.s32.totalorder 0, %v165
    %v167 = vsel %vm166, 0, %v165
    %v168 = vsub.s32 32, %v167
    %v169 = vshll.u32 %v160, %v167
    %v170 = vshrl.u32 %v152, %v168
    %v171 = vor.u32 %v169, %v170
    %v172 = vsub.s32 4294967266, %v167
    %v173 = vadd.s32 %v172, 127
    %v174 = vshll.u32 %v173, 23
    %v175 = vor.u32 4788187, %v174
    %v176 = vand.u32 2147483647, %v175
    %v178 = vcvt.s32.f32 %v171
    %v179 = vmul.f32 %v178, %v176
    %v180 = vxor.u32 %v179, 2147483648
    %v181 = vsel %vm60, %v180, %v179
    %v182 = vsub.s32 4, %v158
    %v183 = vsel %vm60, %v182, %v158
    %v184 = vsel %vm59, %v56, %v181
    %v185 = vsel %vm59, 0, %v183
    %v186 = vmul.f32 %v184, %v184
    %v187 = vmul.f32 %v186, -0.001358992
    %v188 = vadd.f32 %v187, 0.041655596
    %v189 = vmul.f32 %v186, %v188
    %v190 = vadd.f32 %v189, -0.4999988
    %v191 = vmul.f32 %v186, %v190
    %v192 = vadd.f32 1.0, %v191
    %v193 = vmul.f32 %v184, %v184
    %v194 = vmul.f32 %v193, -0.00019511016
    %v195 = vadd.f32 %v194, 0.008332121
    %v196 = vmul.f32 %v193, %v195
    %v197 = vadd.f32 %v196, -0.16666654
    %v198 = vmul.f32 %v193, %v197
    %v199 = vadd.f32 %v198, 1.0
    %v200 = vmul.f32 %v199, %v184
    %vm201 = vweird.f32 %v56
    %v202 = vand.u32 %v185, 3
    %vm203 = vcmp.lt.s32.totalorder %v202, 2
    %vm204 = vcmp.eq.s32.totalorder %v202, 0
    %v205 = vxor.u32 %v200, 2147483648
    %v206 = vsel %vm204, %v192, %v205
    %vm207 = vcmp.eq.s32.totalorder %v202, 2
    %v208 = vxor.u32 %v192, 2147483648
    %v209 = vsel %vm207, %v208, %v200
    %v210 = vsel %vm203, %v206, %v209
    %v211 = vsel %vm201, nan, %v210
    %v212 = vand.u32 2147483647, %v57
    %vm213 = vcmp.le.f32.partialorder %v212, 0.7853982
    %vm214 = vcmp.lt.s32.totalorder %v57, 0
    %v215 = vand.u32 %v57, 2139095040
    %v216 = vshrl.u32 %v215, 23
    %v217 = vsub.s32 %v216, 127
    %v218 = vand.u32 2147483647, %v57
    %v219 = vand.u32 %v218, 8388607
    %v220 = vor.u32 %v219, 8388608
    %v221 = vsub.s32 0, %v220
    %v222 = vadd.s32 %v217, 1
    %vm223 = vcmp.gt.s32.totalorder %v222, 0
    %v224 = vsel %vm223, %v222, 0
    %v225 = vshrl.u32 %v224, 5
    %v226 = vand.u32 %v224, 31
    %v227 = vsub.s32 32, %v226
    %v228 = vshrl.u32 683565275, %v227
    %v229 = vshll.u32 683565275, %v226
    %v230 = vshrl.u32 2475754826, %v227
    %v231 = vor.u32 %v229, %v230
    %v232 = vshll.u32 2475754826, %v226
    %v233 = vshrl.u32 2131351028, %v227
    %v234 = vor.u32 %v232, %v233
    %v235 = vshll.u32 2131351028, %v226
    %v236 = vshrl.u32 2102212464, %v227
    %v237 = vor.u32 %v235, %v236
    %v238 = vshll.u32 2102212464, %v226
    %v239 = vshrl.u32 920167782, %v227
    %v240 = vor.u32 %v238, %v239
    %v241 = vshll.u32 920167782, %v226
    %v242 = vshrl.u32 1326507024, %v227
    %v243 = vor.u32 %v241, %v242
    %vm244 = vcmp.lt.s32.totalorder %v225, 1
    %vm245 = vcmp.lt.s32.totalorder %v225, 2
    %vm246 = vcmp.lt.s32.totalorder %v225, 3
    %vm247 = vcmp.lt.s32.totalorder %v225, 4
    %v248 = vsel %vm244, %v228, %v231
    %v249 = vsel %vm247, %v237, 2102212464
    %v250 = vsel %vm246, %v234, %v249
    %v251 = vsel %vm245, %v248, %v250
    %v252 = vsel %vm244, %v231, %v234
    %v253 = vsel %vm247, %v240, 920167782
    %v254 = vsel %vm246, %v237, %v253
    %v255 = vsel %vm245, %v252, %v254
    %v256 = vsel %vm244, %v234, %v237
    %v257 = vsel %vm247, %v243, 1326507024
    %v258 = vsel %vm246, %v240, %v257
    %v259 = vsel %vm245, %v256, %v258
    %v260 = vshll.u32 %v220, 8
    %v261 = vand.u32 %v260, 65535
    %v262 = vshrl.u32 %v260, 16
    %v263 = vand.u32 %v259, 65535
    %v264 = vshrl.u32 %v259, 16
    %v265 = vmul.u32 %v261, %v263
    %v266 = vmul.u32 %v261, %v264
    %v267 = vmul.u32 %v262, %v263
    %v268 = vmul.u32 %v262, %v264
    %v269 = vshll.u32 %v266, 16
    %v270 = vshrl.u32 %v266, 16
    %v271 = vshll.u32 %v267, 16
    %v272 = vshrl.u32 %v267, 16
    %vm273 = vc.u32 %v265, %v269
    %v274 = vsel %vm273, 1, 0
    %v275 = vadd.s32 %v265, %v269
    %v276 = vadd.s32 %v268, %v274
    %vm277 = vc.u32 %v275, %v271
    %v278 = vsel %vm277, 1, 0
    %v279 = vadd.s32 %v275, %v271
    %v280 = vadd.s32 %v276, %v278
    %v281 = vadd.s32 %v280, %v270
    %v282 = vadd.s32 %v281, %v272
    %v283 = vand.u32 %v260, 65535
    %v284 = vshrl.u32 %v260, 16
    %v285 = vand.u32 %v255, 65535
    %v286 = vshrl.u32 %v255, 16
    %v287 = vmul.u32 %v283, %v285
    %v288 = vmul.u32 %v283, %v286
    %v289 = vmul.u32 %v284, %v285
    %v290 = vmul.u32 %v284, %v286
    %v291 = vshll.u32 %v288, 16
    %v292 = vshrl.u32 %v288, 16
    %v293 = vshll.u32 %v289, 16
    %v294 = vshrl.u32 %v289, 16
    %vm295 = vc.u32 %v287, %v291
    %v296 = vsel %vm295, 1, 0
    %v297 = vadd.s32 %v287, %v291
    %v298 = vadd.s32 %v290, %v296
    %vm299 = vc.u32 %v297, %v293
    %v300 = vsel %vm299, 1, 0
    %v301 = vadd.s32 %v297, %v293
    %v302 = vadd.s32 %v298, %v300
    %v303 = vadd.s32 %v302, %v292
    %v304 = vadd.s32 %v303, %v294
    %v305 = vmul.u32 %v260, %v251
    %v306 = vadd.s32 %v282, %v301
    %vm307 = vc.u32 %v282, %v301
    %v308 = vadd.s32 %v304, 1
    %v309 = vsel %vm307, %v308, %v304
    %v310 = vadd.s32 %v305, %v309
    %v311 = vadd.s32 %v310, 536870912
    %v312 = vshrl.u32 %v311, 30
    %v313 = vshll.u32 %v312, 30
    %v314 = vsub.s32 %v310, %v313
    %vm315 = vcmp.lt.s32.totalorder %v314, 0
    %v316 = vsub.s32 0, %v314
    %v317 = vsel %vm315, %v316, %v314
    %v318 = vclz %v317
    %v319 = vsub.s32 %v318, 2
    %vm320 = vcmp.gt.s32.totalorder 0, %v319
    %v321 = vsel %vm320, 0, %v319
    %v322 = vsub.s32 32, %v321
    %v323 = vshll.u32 %v314, %v321
    %v324 = vshrl.u32 %v306, %v322
    %v325 = vor.u32 %v323, %v324
    %v326 = vsub.s32 4294967266, %v321
    %v327 = vadd.s32 %v326, 127
    %v328 = vshll.u32 %v327, 23
    %v329 = vor.u32 4788187, %v328
    %v330 = vand.u32 2147483647, %v329
    %v332 = vcvt.s32.f32 %v325
    %v333 = vmul.f32 %v332, %v330
    %v334 = vxor.u32 %v333, 2147483648
    %v335 = vsel %vm214, %v334, %v333
    %v336 = vsub.s32 4, %v312
    %v337 = vsel %vm214, %v336, %v312
    %v338 = vsel %vm213, %v57, %v335
    %v339 = vsel %vm213, 0, %v337
    %v340 = vmul.f32 %v338, %v338
    %v341 = vmul.f32 %v340, -0.001358992
    %v342 = vadd.f32 %v341, 0.041655596
    %v343 = vmul.f32 %v340, %v342
    %v344 = vadd.f32 %v343, -0.4999988
    %v345 = vmul.f32 %v340, %v344
    %v346 = vadd.f32 1.0, %v345
    %v347 = vmul.f32 %v338, %v338
    %v348 = vmul.f32 %v347, -0.00019511016
    %v349 = vadd.f32 %v348, 0.008332121
    %v350 = vmul.f32 %v347, %v349
    %v351 = vadd.f32 %v350, -0.16666654
    %v352 = vmul.f32 %v347, %v351
    %v353 = vadd.f32 %v352, 1.0
    %v354 = vmul.f32 %v353, %v338
    %vm355 = vweird.f32 %v57
    %v356 = vand.u32 %v339, 3
    %vm357 = vcmp.lt.s32.totalorder %v356, 2
    %vm358 = vcmp.eq.s32.totalorder %v356, 0
    %v359 = vxor.u32 %v354, 2147483648
    %v360 = vsel %vm358, %v346, %v359
    %vm361 = vcmp.eq.s32.totalorder %v356, 2
    %v362 = vxor.u32 %v346, 2147483648
    %v363 = vsel %vm361, %v362, %v354
    %v364 = vsel %vm357, %v360, %v363
    %v365 = vsel %vm355, nan, %v364
    %v366 = vmul.f32 %v40, %v211
    %v367 = vmul.f32 %v42, %v365
    %368 = vst [vmem:[#allocation2] sm:$0xff] %v366
    %369 = vst [vmem:[#allocation2 + $0x8] sm:$0xff] %v367
    // Predicated region
    $region18: #{tpu_custom_call.1} parent=1 // pred_check
      _
    $region19: #{tpu_custom_call.1} parent=1 // pred_check_branch
      %371 = sbr.rel (0) target = $region21
    $region20: #{tpu_custom_call.1} parent=1 // pred_region
      %373 = vsyncadd [#allocation3], 0
      %s374 = sshll.u32 [#allocation2], 4
      %s375 = int_to_ptr.vmem [resolvable:$true] %s374
      %s376 = sshll.u32 %s4, 4
      %s377 = int_to_ptr.hbm [resolvable:$true] %s376
      %382 = dma.vmem_to_hbm [thread:$0]  %s375, 256, %s377, [#allocation3], 128, 128, 8
    $region21: #{tpu_custom_call.1} parent=1 // pred_fallthru
      _
    // Predicated region
    $region22: #{tpu_custom_call.1} parent=1 // pred_check
      _
    $region23: #{tpu_custom_call.1} parent=1 // pred_check_branch
      %384 = sbr.rel (0) target = $region25
    $region24: #{tpu_custom_call.1} parent=1 // pred_region
      %386 = dma.done [#allocation3], 256
    $region25: #{tpu_custom_call.1} parent=1 // pred_fallthru
      _
    %387 = vsyncpa [#allocation3], 1

</llo_original>
